<compile_context>
chip_gen: v7x
topology: tpu7x:2x2x1
jax: 0.10.0
libtpu: 0.0.40
codegen_flags: <defaults>
</compile_context>

<pallas_src>
import functools
import math

import jax
import jax.numpy as jnp
from jax.experimental import pallas as pl
from jax.experimental.pallas import tpu as pltpu

_BN_EPS = 1e-5


# --------------------------------- kernel ------------------------------------

def _prediction_mlp_kernel(x_ref, w1_ref, b1_ref, g_ref, be_ref, w2_ref, b2_ref,
                           out_ref, acc_ref, *, n_rows):
    """One K-tile of Linear-1; BN + ReLU + Linear-2 epilogue on the last K step."""
    k = pl.program_id(0)

    @pl.when(k == 0)
    def _():
        acc_ref[...] = jnp.zeros_like(acc_ref)

    # f32 activations are cast to bf16 on the VPU right before the MXU; the matmul
    # accumulates in f32.
    acc_ref[...] += jnp.dot(x_ref[...].astype(jnp.bfloat16), w1_ref[...],
                            preferred_element_type=jnp.float32)

    @pl.when(k == pl.num_programs(0) - 1)
    def _():
        h = acc_ref[...] + b1_ref[...]                       # (N, hidden), f32
        inv_n = 1.0 / n_rows
        # Two-pass batch statistics (biased variance, torch train-mode semantics);
        # avoids the E[x^2] - mu^2 cancellation of the single-pass formula.
        mu = jnp.sum(h, axis=0, keepdims=True) * inv_n
        hc = h - mu
        var = jnp.sum(hc * hc, axis=0, keepdims=True) * inv_n
        y = hc * jax.lax.rsqrt(var + _BN_EPS) * g_ref[...] + be_ref[...]
        y = jnp.maximum(y, 0.0)                              # ReLU
        out_ref[...] = (jnp.dot(y.astype(w2_ref.dtype), w2_ref[...],
                                preferred_element_type=jnp.float32)
                        + b2_ref[...]).astype(out_ref.dtype)


# -------------------------------- wrapper -------------------------------------

def prediction_mlp(x, params, *, k_tile=None, out_dtype=jnp.float32):
    """Forward pass of prediction_MLP.

    x:      (N, in_dim) float32
    params: w1 (in_dim, hidden), b1 (1, hidden) f32, gamma/beta (1, hidden) f32,
            w2 (hidden, out_dim), b2 (1, out_dim) f32
    returns (N, out_dim) in out_dtype (default float32)
    """
    n, in_dim = x.shape
    w1, b1 = params["w1"], params["b1"]
    gamma, beta = params["gamma"], params["beta"]
    w2, b2 = params["w2"], params["b2"]
    hidden = w1.shape[1]
    out_dim = w2.shape[1]

    # Lane-dense feature dims (masked partial stores are the big perf killer).
    assert hidden % 128 == 0 and out_dim % 128 == 0, (
        "hidden_dim and out_dim must be multiples of 128 (pad the params)")

    # Pad the K axis only when needed (zero rows/cols are exact for the matmul).
    kp = ((in_dim + 127) // 128) * 128
    if kp != in_dim:
        x = jnp.pad(x, ((0, 0), (0, kp - in_dim)))
        w1 = jnp.pad(w1, ((0, kp - in_dim), (0, 0)))
    x = x.astype(jnp.float32)            # streamed f32; bf16 cast happens in-kernel
    w1 = w1.astype(jnp.bfloat16)
    w2 = w2.astype(jnp.bfloat16)
    out_bytes = jnp.dtype(out_dtype).itemsize

    # ---- generation-aware VMEM budget --------------------------------------
    try:
        vmem_cap = int(pltpu.get_tpu_info().vmem_capacity_bytes)
    except Exception:
        vmem_cap = 64 << 20              # conservative: v7x per-TensorCore VMEM
    vmem_budget = int(vmem_cap * 0.75)   # ~25% headroom for compiler scratch

    # K-independent residency (count double buffers on everything the pipeliner
    # may 2x): w2, biases/affine params, output block, plus the f32 accumulator.
    fixed_bytes = (2 * hidden * out_dim * 2 +            # w2 (bf16)
                   2 * (3 * hidden + out_dim) * 4 +      # b1 / gamma / beta / b2
                   2 * n * out_dim * out_bytes +         # output block
                   n * hidden * 4)                       # f32 accumulator scratch

    def _tile_bytes(kt):                 # double-buffered streamed operands
        return 2 * n * kt * 4 + 2 * kt * hidden * 2      # x (f32) + w1 (bf16)

    # ---- pick the fattest K tile that fits (prefer a single grid step) ------
    if k_tile is None:
        candidates = [kp] + [t for t in (2048, 1024, 512, 256, 128)
                             if t < kp and kp % t == 0]
        k_tile = 128
        for t in candidates:
            if fixed_bytes + _tile_bytes(t) <= vmem_budget:
                k_tile = t
                break
    assert k_tile % 128 == 0 and kp % k_tile == 0, (k_tile, kp)
    n_k_tiles = kp // k_tile

    working_bytes = fixed_bytes + _tile_bytes(k_tile)
    vmem_limit = int(min(max(int(working_bytes * 1.5), 16 << 20), vmem_budget))

    grid_spec = pltpu.PrefetchScalarGridSpec(
        num_scalar_prefetch=0,
        grid=(n_k_tiles,),
        in_specs=[
            pl.BlockSpec((n, k_tile), lambda k: (0, k)),        # x   : streamed over K
            pl.BlockSpec((k_tile, hidden), lambda k: (k, 0)),   # w1  : streamed over K
            pl.BlockSpec((1, hidden), lambda k: (0, 0)),        # b1  : resident
            pl.BlockSpec((1, hidden), lambda k: (0, 0)),        # gamma
            pl.BlockSpec((1, hidden), lambda k: (0, 0)),        # beta
            pl.BlockSpec((hidden, out_dim), lambda k: (0, 0)),  # w2  : resident
            pl.BlockSpec((1, out_dim), lambda k: (0, 0)),       # b2  : resident
        ],
        out_specs=pl.BlockSpec((n, out_dim), lambda k: (0, 0)),
        scratch_shapes=[pltpu.VMEM((n, hidden), jnp.float32)],  # Linear-1 accumulator
    )

    cost = pl.CostEstimate(
        flops=2 * n * kp * hidden + 2 * n * hidden * out_dim + 8 * n * hidden,
        transcendentals=hidden,  # rsqrt for BN
        bytes_accessed=(x.size * 4 + w1.size * 2 + w2.size * 2
                        + (b1.size + gamma.size + beta.size + b2.size) * 4
                        + n * out_dim * out_bytes),
    )

    kernel = functools.partial(_prediction_mlp_kernel, n_rows=float(n))
    return pl.pallas_call(
        kernel,
        out_shape=jax.ShapeDtypeStruct((n, out_dim), out_dtype),
        grid_spec=grid_spec,
        compiler_params=pltpu.CompilerParams(
            dimension_semantics=("arbitrary",),   # K axis is a reduction
            vmem_limit_bytes=vmem_limit,
        ),
        cost_estimate=cost,
    )(x, w1, b1, gamma, beta, w2, b2)


# --------------------------------- demo ---------------------------------------

if __name__ == "__main__":
    key = jax.random.PRNGKey(0)
    ks = jax.random.split(key, 5)

    # Small but lane-dense shapes (feature dims multiples of 128), mirroring
    # prediction_MLP(in_dim=2048, hidden_dim=512, out_dim=2048) scaled down.
    N, IN_DIM, HIDDEN_DIM, OUT_DIM = 128, 256, 128, 256

    x = jax.random.normal(ks[0], (N, IN_DIM), jnp.float32)

    # nn.Linear default init: U(-1/sqrt(fan_in), 1/sqrt(fan_in)).
    b1_bound = 1.0 / math.sqrt(IN_DIM)
    w1 = jax.random.uniform(ks[1], (IN_DIM, HIDDEN_DIM), jnp.float32, -b1_bound, b1_bound)
    b1 = jax.random.uniform(ks[2], (1, HIDDEN_DIM), jnp.float32, -b1_bound, b1_bound)
    b2_bound = 1.0 / math.sqrt(HIDDEN_DIM)
    w2 = jax.random.uniform(ks[3], (HIDDEN_DIM, OUT_DIM), jnp.float32, -b2_bound, b2_bound)
    b2 = jax.random.uniform(ks[4], (1, OUT_DIM), jnp.float32, -b2_bound, b2_bound)

    params = dict(
        w1=w1.astype(jnp.bfloat16), b1=b1,
        gamma=jnp.ones((1, HIDDEN_DIM), jnp.float32),
        beta=jnp.zeros((1, HIDDEN_DIM), jnp.float32),
        w2=w2.astype(jnp.bfloat16), b2=b2,
    )

    out = prediction_mlp(x, params)
    out = jax.block_until_ready(out)

    # Pure-JAX reference with the same bf16 matmul inputs / f32 BN math.
    h = jnp.dot(x.astype(jnp.bfloat16), params["w1"],
                preferred_element_type=jnp.float32) + b1
    mu = jnp.mean(h, axis=0, keepdims=True)
    var = jnp.mean((h - mu) ** 2, axis=0, keepdims=True)
    y = jnp.maximum((h - mu) * jax.lax.rsqrt(var + _BN_EPS)
                    * params["gamma"] + params["beta"], 0.0)
    ref = jnp.dot(y.astype(jnp.bfloat16), params["w2"],
                  preferred_element_type=jnp.float32) + b2

    assert out.shape == (N, OUT_DIM)
    assert jnp.allclose(out, ref, atol=5e-2, rtol=5e-2), (
        float(jnp.max(jnp.abs(out - ref))))
    print("KERNEL_OK")
</pallas_src>

<mosaic_0001>
module attributes {stable_mosaic.version = 11 : i64} {
  func.func @_prediction_mlp_kernel(%arg0: i32, %arg1: memref<128x256xf32, #tpu.memory_space<vmem>>, %arg2: memref<256x128xbf16, #tpu.memory_space<vmem>>, %arg3: memref<1x128xf32, #tpu.memory_space<vmem>>, %arg4: memref<1x128xf32, #tpu.memory_space<vmem>>, %arg5: memref<1x128xf32, #tpu.memory_space<vmem>>, %arg6: memref<128x256xbf16, #tpu.memory_space<vmem>>, %arg7: memref<1x256xf32, #tpu.memory_space<vmem>>, %arg8: memref<128x256xf32, #tpu.memory_space<vmem>>, %arg9: memref<128x128xf32, #tpu.memory_space<vmem>>) attributes {dimension_semantics = [#tpu.dimension_semantics<arbitrary>], iteration_bounds = array<i64: 1>, scalar_prefetch = 0 : i64, scratch_operands = 1 : i64, tpu.core_type = #tpu.core_type<tc>, window_params = [{transform_indices = @transform_0, window_bounds = array<i64: 128, 256>}, {transform_indices = @transform_1, window_bounds = array<i64: 256, 128>}, {pipeline_mode = #tpu.pipeline_mode<synchronous>, transform_indices = @transform_2, window_bounds = array<i64: 1, 128>}, {pipeline_mode = #tpu.pipeline_mode<synchronous>, transform_indices = @transform_3, window_bounds = array<i64: 1, 128>}, {pipeline_mode = #tpu.pipeline_mode<synchronous>, transform_indices = @transform_4, window_bounds = array<i64: 1, 128>}, {pipeline_mode = #tpu.pipeline_mode<synchronous>, transform_indices = @transform_5, window_bounds = array<i64: 128, 256>}, {pipeline_mode = #tpu.pipeline_mode<synchronous>, transform_indices = @transform_6, window_bounds = array<i64: 1, 256>}, {pipeline_mode = #tpu.pipeline_mode<synchronous>, transform_indices = @transform_7, window_bounds = array<i64: 128, 256>}]} {
    %c0_i32 = arith.constant 0 : i32
    %0 = arith.cmpi eq, %arg0, %c0_i32 : i32
    %1 = arith.extui %0 : i1 to i32
    %c0_i32_0 = arith.constant 0 : i32
    %2 = arith.cmpi ne, %1, %c0_i32_0 : i32
    scf.if %2 {
      %cst_10 = arith.constant 0.000000e+00 : f32
      %13 = vector.broadcast %cst_10 : f32 to vector<128x128xf32>
      %c0_11 = arith.constant 0 : index
      %c0_12 = arith.constant 0 : index
      %14 = vector.load %arg9[%c0_11, %c0_12] : memref<128x128xf32, #tpu.memory_space<vmem>>, vector<128x128xf32>
      tpu.vector_store %arg9[%c0_11, %c0_12], %13 {strides = array<i32>} : memref<128x128xf32, #tpu.memory_space<vmem>>, vector<128x128xf32>,
    } else {
    }
    %c0 = arith.constant 0 : index
    %c0_1 = arith.constant 0 : index
    %3 = vector.load %arg9[%c0, %c0_1] : memref<128x128xf32, #tpu.memory_space<vmem>>, vector<128x128xf32>
    %c0_2 = arith.constant 0 : index
    %c0_3 = arith.constant 0 : index
    %4 = vector.load %arg1[%c0_2, %c0_3] : memref<128x256xf32, #tpu.memory_space<vmem>>, vector<128x256xf32>
    %5 = arith.truncf %4 : vector<128x256xf32> to vector<128x256xbf16>
    %c0_4 = arith.constant 0 : index
    %c0_5 = arith.constant 0 : index
    %6 = vector.load %arg2[%c0_4, %c0_5] : memref<256x128xbf16, #tpu.memory_space<vmem>>, vector<256x128xbf16>
    %cst = arith.constant dense<0.000000e+00> : vector<128x128xf32>
    %7 = tpu.matmul %5, %6, %cst {dimension_numbers = #tpu.dot_dimension_numbers<[1], [0], [0], [1], [0, 0, 1, 1], [], []>} : vector<128x256xbf16>, vector<256x128xbf16>, vector<128x128xf32> -> vector<128x128xf32>
    %8 = arith.addf %3, %7 : vector<128x128xf32>
    %c0_6 = arith.constant 0 : index
    %c0_7 = arith.constant 0 : index
    %9 = vector.load %arg9[%c0_6, %c0_7] : memref<128x128xf32, #tpu.memory_space<vmem>>, vector<128x128xf32>
    tpu.vector_store %arg9[%c0_6, %c0_7], %8 {strides = array<i32>} : memref<128x128xf32, #tpu.memory_space<vmem>>, vector<128x128xf32>,
    %c0_i32_8 = arith.constant 0 : i32
    %10 = arith.cmpi eq, %arg0, %c0_i32_8 : i32
    %11 = arith.extui %10 : i1 to i32
    %c0_i32_9 = arith.constant 0 : i32
    %12 = arith.cmpi ne, %11, %c0_i32_9 : i32
    scf.if %12 {
      %c0_10 = arith.constant 0 : index
      %c0_11 = arith.constant 0 : index
      %13 = vector.load %arg9[%c0_10, %c0_11] : memref<128x128xf32, #tpu.memory_space<vmem>>, vector<128x128xf32>
      %c0_12 = arith.constant 0 : index
      %c0_13 = arith.constant 0 : index
      %14 = vector.load %arg3[%c0_12, %c0_13] : memref<1x128xf32, #tpu.memory_space<vmem>>, vector<1x128xf32>
      %15 = vector.broadcast %14 : vector<1x128xf32> to vector<128x128xf32>
      %16 = arith.addf %13, %15 : vector<128x128xf32>
      %cst_14 = arith.constant dense<0.000000e+00> : vector<128xf32>
      %17 = vector.multi_reduction <add>, %16, %cst_14 [0] : vector<128x128xf32> to vector<128xf32>
      %18 = vector.shape_cast %17 : vector<128xf32> to vector<1x128xf32>
      %cst_15 = arith.constant 7.812500e-03 : f32
      %19 = vector.broadcast %cst_15 : f32 to vector<1x128xf32>
      %20 = arith.mulf %18, %19 : vector<1x128xf32>
      %21 = vector.broadcast %20 : vector<1x128xf32> to vector<128x128xf32>
      %22 = arith.subf %16, %21 : vector<128x128xf32>
      %23 = arith.mulf %22, %22 : vector<128x128xf32>
      %cst_16 = arith.constant dense<0.000000e+00> : vector<128xf32>
      %24 = vector.multi_reduction <add>, %23, %cst_16 [0] : vector<128x128xf32> to vector<128xf32>
      %25 = vector.shape_cast %24 : vector<128xf32> to vector<1x128xf32>
      %cst_17 = arith.constant 7.812500e-03 : f32
      %26 = vector.broadcast %cst_17 : f32 to vector<1x128xf32>
      %27 = arith.mulf %25, %26 : vector<1x128xf32>
      %cst_18 = arith.constant 9.99999974E-6 : f32
      %28 = vector.broadcast %cst_18 : f32 to vector<1x128xf32>
      %29 = arith.addf %27, %28 : vector<1x128xf32>
      %30 = math.rsqrt %29 : vector<1x128xf32>
      %31 = vector.broadcast %30 : vector<1x128xf32> to vector<128x128xf32>
      %32 = arith.mulf %22, %31 : vector<128x128xf32>
      %c0_19 = arith.constant 0 : index
      %c0_20 = arith.constant 0 : index
      %33 = vector.load %arg4[%c0_19, %c0_20] : memref<1x128xf32, #tpu.memory_space<vmem>>, vector<1x128xf32>
      %34 = vector.broadcast %33 : vector<1x128xf32> to vector<128x128xf32>
      %35 = arith.mulf %32, %34 : vector<128x128xf32>
      %c0_21 = arith.constant 0 : index
      %c0_22 = arith.constant 0 : index
      %36 = vector.load %arg5[%c0_21, %c0_22] : memref<1x128xf32, #tpu.memory_space<vmem>>, vector<1x128xf32>
      %37 = vector.broadcast %36 : vector<1x128xf32> to vector<128x128xf32>
      %38 = arith.addf %35, %37 : vector<128x128xf32>
      %cst_23 = arith.constant 0.000000e+00 : f32
      %39 = vector.broadcast %cst_23 : f32 to vector<128x128xf32>
      %40 = arith.maximumf %38, %39 : vector<128x128xf32>
      %41 = arith.truncf %40 : vector<128x128xf32> to vector<128x128xbf16>
      %c0_24 = arith.constant 0 : index
      %c0_25 = arith.constant 0 : index
      %42 = vector.load %arg6[%c0_24, %c0_25] : memref<128x256xbf16, #tpu.memory_space<vmem>>, vector<128x256xbf16>
      %cst_26 = arith.constant dense<0.000000e+00> : vector<128x256xf32>
      %43 = tpu.matmul %41, %42, %cst_26 {dimension_numbers = #tpu.dot_dimension_numbers<[1], [0], [0], [1], [0, 0, 1, 1], [], []>} : vector<128x128xbf16>, vector<128x256xbf16>, vector<128x256xf32> -> vector<128x256xf32>
      %c0_27 = arith.constant 0 : index
      %c0_28 = arith.constant 0 : index
      %44 = vector.load %arg7[%c0_27, %c0_28] : memref<1x256xf32, #tpu.memory_space<vmem>>, vector<1x256xf32>
      %45 = vector.broadcast %44 : vector<1x256xf32> to vector<128x256xf32>
      %46 = arith.addf %43, %45 : vector<128x256xf32>
      %c0_29 = arith.constant 0 : index
      %c0_30 = arith.constant 0 : index
      %47 = vector.load %arg8[%c0_29, %c0_30] : memref<128x256xf32, #tpu.memory_space<vmem>>, vector<128x256xf32>
      tpu.vector_store %arg8[%c0_29, %c0_30], %46 {strides = array<i32>} : memref<128x256xf32, #tpu.memory_space<vmem>>, vector<128x256xf32>,
    } else {
    }
    return
  }
  func.func @transform_0(%arg0: i32) -> (i32, i32) {
    %c0_i32 = arith.constant 0 : i32
    %c0_i32_0 = arith.constant 0 : i32
    return %c0_i32, %arg0 : i32, i32
  }
  func.func @transform_1(%arg0: i32) -> (i32, i32) {
    %c0_i32 = arith.constant 0 : i32
    %c0_i32_0 = arith.constant 0 : i32
    return %arg0, %c0_i32 : i32, i32
  }
  func.func @transform_2(%arg0: i32) -> (i32, i32) {
    %c0_i32 = arith.constant 0 : i32
    %c0_i32_0 = arith.constant 0 : i32
    %c0_i32_1 = arith.constant 0 : i32
    return %c0_i32, %c0_i32_0 : i32, i32
  }
  func.func @transform_3(%arg0: i32) -> (i32, i32) {
    %c0_i32 = arith.constant 0 : i32
    %c0_i32_0 = arith.constant 0 : i32
    %c0_i32_1 = arith.constant 0 : i32
    return %c0_i32, %c0_i32_0 : i32, i32
  }
  func.func @transform_4(%arg0: i32) -> (i32, i32) {
    %c0_i32 = arith.constant 0 : i32
    %c0_i32_0 = arith.constant 0 : i32
    %c0_i32_1 = arith.constant 0 : i32
    return %c0_i32, %c0_i32_0 : i32, i32
  }
  func.func @transform_5(%arg0: i32) -> (i32, i32) {
    %c0_i32 = arith.constant 0 : i32
    %c0_i32_0 = arith.constant 0 : i32
    %c0_i32_1 = arith.constant 0 : i32
    return %c0_i32, %c0_i32_0 : i32, i32
  }
  func.func @transform_6(%arg0: i32) -> (i32, i32) {
    %c0_i32 = arith.constant 0 : i32
    %c0_i32_0 = arith.constant 0 : i32
    %c0_i32_1 = arith.constant 0 : i32
    return %c0_i32, %c0_i32_0 : i32, i32
  }
  func.func @transform_7(%arg0: i32) -> (i32, i32) {
    %c0_i32 = arith.constant 0 : i32
    %c0_i32_0 = arith.constant 0 : i32
    %c0_i32_1 = arith.constant 0 : i32
    return %c0_i32, %c0_i32_0 : i32, i32
  }
}

</mosaic_0001>

<llo_original>
// kernel: tpu_custom_call.1
$region0: #{tpu_custom_call.1}
  #allocation0 [shape = 'u32[]', space=smem, size = 0x4, offset = 0x4, fixed_abs, tag = 'smem constant byte address 0x4 - core index']
  #allocation1 [shape = 'u32[144,128]{1,0:T(1,128)}', space=vmem, size = 0x12000, scoped, tag = 'internal scratch']
  #allocation2 [shape = 'f32[128,128]{1,0:T(8,128)}', space=vmem, size = 0x10000, scoped, tag = 'scratch operand']
  %s0 = inlined_call_operand.hbm [shape: f32[128,256], index: 0, kind: input, shape index: {}]
  %s1 = inlined_call_operand.hbm [shape: bf16[256,128], index: 1, kind: input, shape index: {}]
  %s2 = inlined_call_operand.vmem [shape: f32[1,128], index: 2, kind: input, shape index: {}]
  %s3 = inlined_call_operand.vmem [shape: f32[1,128], index: 3, kind: input, shape index: {}]
  %s4 = inlined_call_operand.vmem [shape: f32[1,128], index: 4, kind: input, shape index: {}]
  %s5 = inlined_call_operand.hbm [shape: bf16[128,256], index: 5, kind: input, shape index: {}]
  %s6 = inlined_call_operand.vmem [shape: f32[1,256], index: 6, kind: input, shape index: {}]
  %s7 = inlined_call_operand.hbm [shape: f32[128,256], index: 7, kind: output, shape index: {}]
  %s8 = sld [smem:[#allocation0]]
  $region58: #{tpu_custom_call.1} parent=0
    _
  %s10 = ssub.s32 1, %s8
  %s11 = scalar_select 0, %s10, %s8
  $region1: #{tpu_custom_call.1} parent=0
    #allocation3 [shape = 'u8[131072]{0}', space=vmem, size = 0x20000, scoped, tag = 'input window, operand 0, single buffered']
    #allocation4 [shape = 's32[1]{0}', space=sflag, size = 0x4, scoped, tag = 'scoped memory for tpu_custom_call.1']
    #allocation5 [shape = 's32[1]{0}', space=sflag, size = 0x4, scoped, tag = 'scoped memory for tpu_custom_call.1']
    #allocation6 [shape = 'u8[65536]{0}', space=vmem, size = 0x10000, scoped, tag = 'input window, operand 1, single buffered']
    #allocation7 [shape = 's32[1]{0}', space=sflag, size = 0x4, scoped, tag = 'scoped memory for tpu_custom_call.1']
    #allocation8 [shape = 'u8[65536]{0}', space=vmem, size = 0x10000, scoped, tag = 'input window, operand 5, single buffered']
    #allocation9 [shape = 'u8[131072]{0}', space=vmem, size = 0x20000, scoped, tag = 'output window, operand 0, single buffered']
    %12 = vsyncpa [#allocation4], 0
    %13 = vsyncpa [#allocation7], 0
    %14 = vsyncpa [#allocation5], 0
    // Predicated region
    $region2: #{tpu_custom_call.1} parent=1 // pred_check
      _
    $region3: #{tpu_custom_call.1} parent=1 // pred_check_branch
      %16 = sbr.rel (0) target = $region5
    $region4: #{tpu_custom_call.1} parent=1 // pred_region
      %s18 = ssub.s32 4096, 4096
      %19 = vsyncadd [#allocation4], %s18
      %s20 = sshll.u32 [#allocation3], 4
      %s21 = int_to_ptr.vmem [resolvable:$true] %s20
      %26 = dma.hbm_to_vmem [thread:$0]  %s0, 4096, %s21, [#allocation4], 256, 256, 16
    $region5: #{tpu_custom_call.1} parent=1 // pred_fallthru
      _
    // Predicated region
    $region6: #{tpu_custom_call.1} parent=1 // pred_check
      _
    $region7: #{tpu_custom_call.1} parent=1 // pred_check_branch
      %28 = sbr.rel (0) target = $region9
    $region8: #{tpu_custom_call.1} parent=1 // pred_region
      %s30 = ssub.s32 2048, 2048
      %31 = vsyncadd [#allocation7], %s30
      %s32 = sshll.u32 [#allocation6], 4
      %s33 = int_to_ptr.vmem [resolvable:$true] %s32
      %38 = dma.hbm_to_vmem [thread:$0]  %s1, 2048, %s33, [#allocation7], 64, 64, 4
    $region9: #{tpu_custom_call.1} parent=1 // pred_fallthru
      _
    // Predicated region
    $region10: #{tpu_custom_call.1} parent=1 // pred_check
      _
    $region11: #{tpu_custom_call.1} parent=1 // pred_check_branch
      %40 = sbr.rel (0) target = $region13
    $region12: #{tpu_custom_call.1} parent=1 // pred_region
      _
    $region13: #{tpu_custom_call.1} parent=1 // pred_fallthru
      _
    // Predicated region
    $region14: #{tpu_custom_call.1} parent=1 // pred_check
      _
    $region15: #{tpu_custom_call.1} parent=1 // pred_check_branch
      %42 = sbr.rel (0) target = $region17
    $region16: #{tpu_custom_call.1} parent=1 // pred_region
      _
    $region17: #{tpu_custom_call.1} parent=1 // pred_fallthru
      _
    // Predicated region
    $region18: #{tpu_custom_call.1} parent=1 // pred_check
      _
    $region19: #{tpu_custom_call.1} parent=1 // pred_check_branch
      %44 = sbr.rel (0) target = $region21
    $region20: #{tpu_custom_call.1} parent=1 // pred_region
      _
    $region21: #{tpu_custom_call.1} parent=1 // pred_fallthru
      _
    // Predicated region
    $region22: #{tpu_custom_call.1} parent=1 // pred_check
      _
    $region23: #{tpu_custom_call.1} parent=1 // pred_check_branch
      %46 = sbr.rel (0) target = $region25
    $region24: #{tpu_custom_call.1} parent=1 // pred_region
      %s48 = ssub.s32 2048, 2048
      %49 = vsyncadd [#allocation7], %s48
      %s50 = sshll.u32 [#allocation8], 4
      %s51 = int_to_ptr.vmem [resolvable:$true] %s50
      %56 = dma.hbm_to_vmem [thread:$0]  %s5, 2048, %s51, [#allocation7], 128, 128, 8
    $region25: #{tpu_custom_call.1} parent=1 // pred_fallthru
      _
    // Predicated region
    $region26: #{tpu_custom_call.1} parent=1 // pred_check
      _
    $region27: #{tpu_custom_call.1} parent=1 // pred_check_branch
      %58 = sbr.rel (0) target = $region29
    $region28: #{tpu_custom_call.1} parent=1 // pred_region
      _
    $region29: #{tpu_custom_call.1} parent=1 // pred_fallthru
      _
    // Predicated region
    $region30: #{tpu_custom_call.1} parent=1 // pred_check
      _
    $region31: #{tpu_custom_call.1} parent=1 // pred_check_branch
      %60 = sbr.rel (0) target = $region33
    $region32: #{tpu_custom_call.1} parent=1 // pred_region
      %61 = dma.done [#allocation4], 4096
    $region33: #{tpu_custom_call.1} parent=1 // pred_fallthru
      _
    // Predicated region
    $region34: #{tpu_custom_call.1} parent=1 // pred_check
      _
    $region35: #{tpu_custom_call.1} parent=1 // pred_check_branch
      %63 = sbr.rel (0) target = $region37
    $region36: #{tpu_custom_call.1} parent=1 // pred_region
      %64 = dma.done [#allocation7], 2048
    $region37: #{tpu_custom_call.1} parent=1 // pred_fallthru
      _
    // Predicated region
    $region38: #{tpu_custom_call.1} parent=1 // pred_check
      _
    $region39: #{tpu_custom_call.1} parent=1 // pred_check_branch
      %66 = sbr.rel (0) target = $region41
    $region40: #{tpu_custom_call.1} parent=1 // pred_region
      %67 = dma.done [#allocation7], 2048
    $region41: #{tpu_custom_call.1} parent=1 // pred_fallthru
      _
    %p69 = scmp.eq.s32.totalorder 0, 0
    // Predicated region
    $region42: #{tpu_custom_call.1} parent=1 // pred_check
      %p70 = pneg %p69
    $region43: #{tpu_custom_call.1} parent=1 // pred_check_branch
      %72 = sbr.rel (%p70) target = $region45
    $region44: #{tpu_custom_call.1} parent=1 // pred_region
      %73 = vst [vmem:[#allocation2] sm:$0xff] 0.0
      %74 = vst [vmem:[#allocation2 + $0x8] sm:$0xff] 0.0
      %75 = vst [vmem:[#allocation2 + $0x10] sm:$0xff] 0.0
      %76 = vst [vmem:[#allocation2 + $0x18] sm:$0xff] 0.0
      %77 = vst [vmem:[#allocation2 + $0x20] sm:$0xff] 0.0
      %78 = vst [vmem:[#allocation2 + $0x28] sm:$0xff] 0.0
      %79 = vst [vmem:[#allocation2 + $0x30] sm:$0xff] 0.0
      %80 = vst [vmem:[#allocation2 + $0x38] sm:$0xff] 0.0
      %81 = vst [vmem:[#allocation2 + $0x40] sm:$0xff] 0.0
      %82 = vst [vmem:[#allocation2 + $0x48] sm:$0xff] 0.0
      %83 = vst [vmem:[#allocation2 + $0x50] sm:$0xff] 0.0
      %84 = vst [vmem:[#allocation2 + $0x58] sm:$0xff] 0.0
      %85 = vst [vmem:[#allocation2 + $0x60] sm:$0xff] 0.0
      %86 = vst [vmem:[#allocation2 + $0x68] sm:$0xff] 0.0
      %87 = vst [vmem:[#allocation2 + $0x70] sm:$0xff] 0.0
      %88 = vst [vmem:[#allocation2 + $0x78] sm:$0xff] 0.0
    $region45: #{tpu_custom_call.1} parent=1 // pred_fallthru
      _
    %v89 = vld [vmem:[#allocation2] sm:$0xff]
    %v90 = vld [vmem:[#allocation2 + $0x8] sm:$0xff]
    %v91 = vld [vmem:[#allocation2 + $0x10] sm:$0xff]
    %v92 = vld [vmem:[#allocation2 + $0x18] sm:$0xff]
    %v93 = vld [vmem:[#allocation2 + $0x20] sm:$0xff]
    %v94 = vld [vmem:[#allocation2 + $0x28] sm:$0xff]
    %v95 = vld [vmem:[#allocation2 + $0x30] sm:$0xff]
    %v96 = vld [vmem:[#allocation2 + $0x38] sm:$0xff]
    %v97 = vld [vmem:[#allocation2 + $0x40] sm:$0xff]
    %v98 = vld [vmem:[#allocation2 + $0x48] sm:$0xff]
    %v99 = vld [vmem:[#allocation2 + $0x50] sm:$0xff]
    %v100 = vld [vmem:[#allocation2 + $0x58] sm:$0xff]
    %v101 = vld [vmem:[#allocation2 + $0x60] sm:$0xff]
    %v102 = vld [vmem:[#allocation2 + $0x68] sm:$0xff]
    %v103 = vld [vmem:[#allocation2 + $0x70] sm:$0xff]
    %v104 = vld [vmem:[#allocation2 + $0x78] sm:$0xff]
    %v105 = vld [vmem:[#allocation3] sm:$0xff]
    %v106 = vld [vmem:[#allocation3 + $0x8] sm:$0xff]
    %v107 = vld [vmem:[#allocation3 + $0x10] sm:$0xff]
    %v108 = vld [vmem:[#allocation3 + $0x18] sm:$0xff]
    %v109 = vld [vmem:[#allocation3 + $0x20] sm:$0xff]
    %v110 = vld [vmem:[#allocation3 + $0x28] sm:$0xff]
    %v111 = vld [vmem:[#allocation3 + $0x30] sm:$0xff]
    %v112 = vld [vmem:[#allocation3 + $0x38] sm:$0xff]
    %v113 = vld [vmem:[#allocation3 + $0x40] sm:$0xff]
    %v114 = vld [vmem:[#allocation3 + $0x48] sm:$0xff]
    %v115 = vld [vmem:[#allocation3 + $0x50] sm:$0xff]
    %v116 = vld [vmem:[#allocation3 + $0x58] sm:$0xff]
    %v117 = vld [vmem:[#allocation3 + $0x60] sm:$0xff]
    %v118 = vld [vmem:[#allocation3 + $0x68] sm:$0xff]
    %v119 = vld [vmem:[#allocation3 + $0x70] sm:$0xff]
    %v120 = vld [vmem:[#allocation3 + $0x78] sm:$0xff]
    %v121 = vld [vmem:[#allocation3 + $0x80] sm:$0xff]
    %v122 = vld [vmem:[#allocation3 + $0x88] sm:$0xff]
    %v123 = vld [vmem:[#allocation3 + $0x90] sm:$0xff]
    %v124 = vld [vmem:[#allocation3 + $0x98] sm:$0xff]
    %v125 = vld [vmem:[#allocation3 + $0xa0] sm:$0xff]
    %v126 = vld [vmem:[#allocation3 + $0xa8] sm:$0xff]
    %v127 = vld [vmem:[#allocation3 + $0xb0] sm:$0xff]
    %v128 = vld [vmem:[#allocation3 + $0xb8] sm:$0xff]
    %v129 = vld [vmem:[#allocation3 + $0xc0] sm:$0xff]
    %v130 = vld [vmem:[#allocation3 + $0xc8] sm:$0xff]
    %v131 = vld [vmem:[#allocation3 + $0xd0] sm:$0xff]
    %v132 = vld [vmem:[#allocation3 + $0xd8] sm:$0xff]
    %v133 = vld [vmem:[#allocation3 + $0xe0] sm:$0xff]
    %v134 = vld [vmem:[#allocation3 + $0xe8] sm:$0xff]
    %v135 = vld [vmem:[#allocation3 + $0xf0] sm:$0xff]
    %v136 = vld [vmem:[#allocation3 + $0xf8] sm:$0xff]
    %v137 = vpack.c.bf16 %v107, %v105
    %v138 = vpack.c.bf16 %v108, %v106
    %v139 = vpack.c.bf16 %v111, %v109
    %v140 = vpack.c.bf16 %v112, %v110
    %v141 = vpack.c.bf16 %v115, %v113
    %v142 = vpack.c.bf16 %v116, %v114
    %v143 = vpack.c.bf16 %v119, %v117
    %v144 = vpack.c.bf16 %v120, %v118
    %v145 = vpack.c.bf16 %v123, %v121
    %v146 = vpack.c.bf16 %v124, %v122
    %v147 = vpack.c.bf16 %v127, %v125
    %v148 = vpack.c.bf16 %v128, %v126
    %v149 = vpack.c.bf16 %v131, %v129
    %v150 = vpack.c.bf16 %v132, %v130
    %v151 = vpack.c.bf16 %v135, %v133
    %v152 = vpack.c.bf16 %v136, %v134
    %v153 = vld [vmem:[#allocation6] sm:$0xf]
    %v154 = vld [vmem:[#allocation6 + $0x4] sm:$0xf]
    %v155 = vld [vmem:[#allocation6 + $0x8] sm:$0xf]
    %v156 = vld [vmem:[#allocation6 + $0xc] sm:$0xf]
    %v157 = vld [vmem:[#allocation6 + $0x10] sm:$0xf]
    %v158 = vld [vmem:[#allocation6 + $0x14] sm:$0xf]
    %v159 = vld [vmem:[#allocation6 + $0x18] sm:$0xf]
    %v160 = vld [vmem:[#allocation6 + $0x1c] sm:$0xf]
    %v161 = vld [vmem:[#allocation6 + $0x20] sm:$0xf]
    %v162 = vld [vmem:[#allocation6 + $0x24] sm:$0xf]
    %v163 = vld [vmem:[#allocation6 + $0x28] sm:$0xf]
    %v164 = vld [vmem:[#allocation6 + $0x2c] sm:$0xf]
    %v165 = vld [vmem:[#allocation6 + $0x30] sm:$0xf]
    %v166 = vld [vmem:[#allocation6 + $0x34] sm:$0xf]
    %v167 = vld [vmem:[#allocation6 + $0x38] sm:$0xf]
    %v168 = vld [vmem:[#allocation6 + $0x3c] sm:$0xf]
    %v169 = vld [vmem:[#allocation6 + $0x40] sm:$0xf]
    %v170 = vld [vmem:[#allocation6 + $0x44] sm:$0xf]
    %v171 = vld [vmem:[#allocation6 + $0x48] sm:$0xf]
    %v172 = vld [vmem:[#allocation6 + $0x4c] sm:$0xf]
    %v173 = vld [vmem:[#allocation6 + $0x50] sm:$0xf]
    %v174 = vld [vmem:[#allocation6 + $0x54] sm:$0xf]
    %v175 = vld [vmem:[#allocation6 + $0x58] sm:$0xf]
    %v176 = vld [vmem:[#allocation6 + $0x5c] sm:$0xf]
    %v177 = vld [vmem:[#allocation6 + $0x60] sm:$0xf]
    %v178 = vld [vmem:[#allocation6 + $0x64] sm:$0xf]
    %v179 = vld [vmem:[#allocation6 + $0x68] sm:$0xf]
    %v180 = vld [vmem:[#allocation6 + $0x6c] sm:$0xf]
    %v181 = vld [vmem:[#allocation6 + $0x70] sm:$0xf]
    %v182 = vld [vmem:[#allocation6 + $0x74] sm:$0xf]
    %v183 = vld [vmem:[#allocation6 + $0x78] sm:$0xf]
    %v184 = vld [vmem:[#allocation6 + $0x7c] sm:$0xf]
    %v217 = vunpack.c.l.b16 %v153
    %v218 = vunpack.c.l.b16 %v154
    %v219 = vunpack.c.l.b16 %v155
    %v220 = vunpack.c.l.b16 %v156
    %v221 = vunpack.c.l.b16 %v157
    %v222 = vunpack.c.l.b16 %v158
    %v223 = vunpack.c.l.b16 %v159
    %v224 = vunpack.c.l.b16 %v160
    %v225 = vunpack.c.l.b16 %v161
    %v226 = vunpack.c.l.b16 %v162
    %v227 = vunpack.c.l.b16 %v163
    %v228 = vunpack.c.l.b16 %v164
    %v229 = vunpack.c.l.b16 %v165
    %v230 = vunpack.c.l.b16 %v166
    %v231 = vunpack.c.l.b16 %v167
    %v232 = vunpack.c.l.b16 %v168
    %v233 = vunpack.c.l.b16 %v169
    %v234 = vunpack.c.l.b16 %v170
    %v235 = vunpack.c.l.b16 %v171
    %v236 = vunpack.c.l.b16 %v172
    %v237 = vunpack.c.l.b16 %v173
    %v238 = vunpack.c.l.b16 %v174
    %v239 = vunpack.c.l.b16 %v175
    %v240 = vunpack.c.l.b16 %v176
    %v241 = vunpack.c.l.b16 %v177
    %v242 = vunpack.c.l.b16 %v178
    %v243 = vunpack.c.l.b16 %v179
    %v244 = vunpack.c.l.b16 %v180
    %v245 = vunpack.c.l.b16 %v181
    %v246 = vunpack.c.l.b16 %v182
    %v247 = vunpack.c.l.b16 %v183
    %v248 = vunpack.c.l.b16 %v184
    %v249 = vpack.c.b16 %v218, %v217
    %v250 = vpack.c.b16 %v220, %v219
    %v251 = vpack.c.b16 %v222, %v221
    %v252 = vpack.c.b16 %v224, %v223
    %v253 = vpack.c.b16 %v226, %v225
    %v254 = vpack.c.b16 %v228, %v227
    %v255 = vpack.c.b16 %v230, %v229
    %v256 = vpack.c.b16 %v232, %v231
    %v257 = vpack.c.b16 %v234, %v233
    %v258 = vpack.c.b16 %v236, %v235
    %v259 = vpack.c.b16 %v238, %v237
    %v260 = vpack.c.b16 %v240, %v239
    %v261 = vpack.c.b16 %v242, %v241
    %v262 = vpack.c.b16 %v244, %v243
    %v263 = vpack.c.b16 %v246, %v245
    %v264 = vpack.c.b16 %v248, %v247
    %281 = vmatprep.subr.bf16.mxu0 0
    %282 = vmatpush1.bf16.msra.mxu0 %v249
    %283 = vmatprep.subr.bf16.mxu0 0
    %284 = vmatpush1.bf16.msra.mxu0 %v250
    %285 = vmatprep.subr.bf16.mxu0 0
    %286 = vmatpush1.bf16.msra.mxu0 %v251
    %287 = vmatprep.subr.bf16.mxu0 0
    %288 = vmatpush1.bf16.msra.mxu0 %v252
    %289 = vmatprep.subr.bf16.mxu0 0
    %290 = vmatpush1.bf16.msra.mxu0 %v253
    %291 = vmatprep.subr.bf16.mxu0 0
    %292 = vmatpush1.bf16.msra.mxu0 %v254
    %293 = vmatprep.subr.bf16.mxu0 0
    %294 = vmatpush1.bf16.msra.mxu0 %v255
    %295 = vmatprep.subr.bf16.mxu0 0
    %296 = vmatpush1.bf16.msra.mxu0 %v256
    %297 = vmatprep.subr.bf16.mxu0 0
    %298 = vmatpush1.bf16.msra.mxu0 %v257
    %299 = vmatprep.subr.bf16.mxu0 0
    %300 = vmatpush1.bf16.msra.mxu0 %v258
    %301 = vmatprep.subr.bf16.mxu0 0
    %302 = vmatpush1.bf16.msra.mxu0 %v259
    %303 = vmatprep.subr.bf16.mxu0 0
    %304 = vmatpush1.bf16.msra.mxu0 %v260
    %305 = vmatprep.subr.bf16.mxu0 0
    %306 = vmatpush1.bf16.msra.mxu0 %v261
    %307 = vmatprep.subr.bf16.mxu0 0
    %308 = vmatpush1.bf16.msra.mxu0 %v262
    %309 = vmatprep.subr.bf16.mxu0 0
    %310 = vmatpush1.bf16.msra.mxu0 %v263
    %311 = vmatprep.subr.bf16.mxu0 0
    %312 = vmatpush1.bf16.msra.mxu0 %v264
    %313 = vmatprep.mubr.bf16.mxu0 %v138
    %314 = vmatmul.mubr.bf16.gmra.mrb[0].mxu0 %v137
    %v315 = vpop.f32.mrb[0].mxu0
    %v316 = vadd.f32 0.0, %v315
    %v317 = vpop.f32.mrb[0].mxu0
    %v318 = vpop.f32.mrb[0].mxu0
    %v319 = vadd.f32 0.0, %v318
    %v320 = vpop.f32.mrb[0].mxu0
    %321 = vmatprep.mubr.bf16.mxu0 %v140
    %322 = vmatmul.mubr.bf16.gmra.mrb[0].mxu0 %v139
    %v323 = vpop.f32.mrb[0].mxu0
    %v324 = vadd.f32 0.0, %v323
    %v325 = vpop.f32.mrb[0].mxu0
    %v326 = vpop.f32.mrb[0].mxu0
    %v327 = vadd.f32 0.0, %v326
    %v328 = vpop.f32.mrb[0].mxu0
    %329 = vmatprep.mubr.bf16.mxu0 %v142
    %330 = vmatmul.mubr.bf16.gmra.mrb[0].mxu0 %v141
    %v331 = vpop.f32.mrb[0].mxu0
    %v332 = vadd.f32 0.0, %v331
    %v333 = vpop.f32.mrb[0].mxu0
    %v334 = vpop.f32.mrb[0].mxu0
    %v335 = vadd.f32 0.0, %v334
    %v336 = vpop.f32.mrb[0].mxu0
    %337 = vmatprep.mubr.bf16.mxu0 %v144
    %338 = vmatmul.mubr.bf16.gmra.mrb[0].mxu0 %v143
    %v339 = vpop.f32.mrb[0].mxu0
    %v340 = vadd.f32 0.0, %v339
    %v341 = vpop.f32.mrb[0].mxu0
    %v342 = vpop.f32.mrb[0].mxu0
    %v343 = vadd.f32 0.0, %v342
    %v344 = vpop.f32.mrb[0].mxu0
    %345 = vmatprep.mubr.bf16.mxu0 %v146
    %346 = vmatmul.mubr.bf16.gmra.mrb[0].mxu0 %v145
    %v347 = vpop.f32.mrb[0].mxu0
    %v348 = vadd.f32 0.0, %v347
    %v349 = vpop.f32.mrb[0].mxu0
    %v350 = vpop.f32.mrb[0].mxu0
    %v351 = vadd.f32 0.0, %v350
    %v352 = vpop.f32.mrb[0].mxu0
    %353 = vmatprep.mubr.bf16.mxu0 %v148
    %354 = vmatmul.mubr.bf16.gmra.mrb[0].mxu0 %v147
    %v355 = vpop.f32.mrb[0].mxu0
    %v356 = vadd.f32 0.0, %v355
    %v357 = vpop.f32.mrb[0].mxu0
    %v358 = vpop.f32.mrb[0].mxu0
    %v359 = vadd.f32 0.0, %v358
    %v360 = vpop.f32.mrb[0].mxu0
    %361 = vmatprep.mubr.bf16.mxu0 %v150
    %362 = vmatmul.mubr.bf16.gmra.mrb[0].mxu0 %v149
    %v363 = vpop.f32.mrb[0].mxu0
    %v364 = vadd.f32 0.0, %v363
    %v365 = vpop.f32.mrb[0].mxu0
    %v366 = vpop.f32.mrb[0].mxu0
    %v367 = vadd.f32 0.0, %v366
    %v368 = vpop.f32.mrb[0].mxu0
    %369 = vmatprep.mubr.bf16.mxu0 %v152
    %370 = vmatmul.mubr.bf16.gmra.mrb[0].mxu0 %v151
    %v371 = vpop.f32.mrb[0].mxu0
    %v372 = vadd.f32 0.0, %v371
    %v373 = vpop.f32.mrb[0].mxu0
    %v374 = vpop.f32.mrb[0].mxu0
    %v375 = vadd.f32 0.0, %v374
    %v376 = vpop.f32.mrb[0].mxu0
    %377 = vdwg.mxu0
    %v378 = vadd.f32 %v89, %v316
    %v379 = vadd.f32 %v90, %v319
    %v380 = vadd.f32 %v91, %v324
    %v381 = vadd.f32 %v92, %v327
    %v382 = vadd.f32 %v93, %v332
    %v383 = vadd.f32 %v94, %v335
    %v384 = vadd.f32 %v95, %v340
    %v385 = vadd.f32 %v96, %v343
    %v386 = vadd.f32 %v97, %v348
    %v387 = vadd.f32 %v98, %v351
    %v388 = vadd.f32 %v99, %v356
    %v389 = vadd.f32 %v100, %v359
    %v390 = vadd.f32 %v101, %v364
    %v391 = vadd.f32 %v102, %v367
    %v392 = vadd.f32 %v103, %v372
    %v393 = vadd.f32 %v104, %v375
    %394 = vst [vmem:[#allocation2] sm:$0xff] %v378
    %395 = vst [vmem:[#allocation2 + $0x8] sm:$0xff] %v379
    %396 = vst [vmem:[#allocation2 + $0x10] sm:$0xff] %v380
    %397 = vst [vmem:[#allocation2 + $0x18] sm:$0xff] %v381
    %398 = vst [vmem:[#allocation2 + $0x20] sm:$0xff] %v382
    %399 = vst [vmem:[#allocation2 + $0x28] sm:$0xff] %v383
    %400 = vst [vmem:[#allocation2 + $0x30] sm:$0xff] %v384
    %401 = vst [vmem:[#allocation2 + $0x38] sm:$0xff] %v385
    %402 = vst [vmem:[#allocation2 + $0x40] sm:$0xff] %v386
    %403 = vst [vmem:[#allocation2 + $0x48] sm:$0xff] %v387
    %404 = vst [vmem:[#allocation2 + $0x50] sm:$0xff] %v388
    %405 = vst [vmem:[#allocation2 + $0x58] sm:$0xff] %v389
    %406 = vst [vmem:[#allocation2 + $0x60] sm:$0xff] %v390
    %407 = vst [vmem:[#allocation2 + $0x68] sm:$0xff] %v391
    %408 = vst [vmem:[#allocation2 + $0x70] sm:$0xff] %v392
    %409 = vst [vmem:[#allocation2 + $0x78] sm:$0xff] %v393
    // Predicated region
    $region46: #{tpu_custom_call.1} parent=1 // pred_check
      %p410 = pneg %p69
    $region47: #{tpu_custom_call.1} parent=1 // pred_check_branch
      %412 = sbr.rel (%p410) target = $region49
    $region48: #{tpu_custom_call.1} parent=1 // pred_region
      %v413 = vld [vmem:[#allocation2] sm:$0xff]
      %v414 = vld [vmem:[#allocation2 + $0x8] sm:$0xff]
      %v415 = vld [vmem:[#allocation2 + $0x10] sm:$0xff]
      %v416 = vld [vmem:[#allocation2 + $0x18] sm:$0xff]
      %v417 = vld [vmem:[#allocation2 + $0x20] sm:$0xff]
      %v418 = vld [vmem:[#allocation2 + $0x28] sm:$0xff]
      %v419 = vld [vmem:[#allocation2 + $0x30] sm:$0xff]
      %v420 = vld [vmem:[#allocation2 + $0x38] sm:$0xff]
      %v421 = vld [vmem:[#allocation2 + $0x40] sm:$0xff]
      %v422 = vld [vmem:[#allocation2 + $0x48] sm:$0xff]
      %v423 = vld [vmem:[#allocation2 + $0x50] sm:$0xff]
      %v424 = vld [vmem:[#allocation2 + $0x58] sm:$0xff]
      %v425 = vld [vmem:[#allocation2 + $0x60] sm:$0xff]
      %v426 = vld [vmem:[#allocation2 + $0x68] sm:$0xff]
      %v427 = vld [vmem:[#allocation2 + $0x70] sm:$0xff]
      %v428 = vld [vmem:[#allocation2 + $0x78] sm:$0xff]
      %v429 = vld [vmem:[%s2] sm:$0x1]
      %v431 = vlaneseq
      %v432 = vshrl.u32 %v431, 7
      %v433 = vsub.s32 0, %v432
      %v434 = vrot.slane %v429, %v433
      %v436 = vadd.f32 %v413, %v434
      %v437 = vadd.f32 %v414, %v434
      %v438 = vadd.f32 %v415, %v434
      %v439 = vadd.f32 %v416, %v434
      %v440 = vadd.f32 %v417, %v434
      %v441 = vadd.f32 %v418, %v434
      %v442 = vadd.f32 %v419, %v434
      %v443 = vadd.f32 %v420, %v434
      %v444 = vadd.f32 %v421, %v434
      %v445 = vadd.f32 %v422, %v434
      %v446 = vadd.f32 %v423, %v434
      %v447 = vadd.f32 %v424, %v434
      %v448 = vadd.f32 %v425, %v434
      %v449 = vadd.f32 %v426, %v434
      %v450 = vadd.f32 %v427, %v434
      %v451 = vadd.f32 %v428, %v434
      %v452 = vadd.f32 %v436, %v437
      %v453 = vadd.f32 %v452, %v438
      %v454 = vadd.f32 %v453, %v439
      %v455 = vadd.f32 %v454, %v440
      %v456 = vadd.f32 %v455, %v441
      %v457 = vadd.f32 %v456, %v442
      %v458 = vadd.f32 %v457, %v443
      %v459 = vadd.f32 %v458, %v444
      %v460 = vadd.f32 %v459, %v445
      %v461 = vadd.f32 %v460, %v446
      %v462 = vadd.f32 %v461, %v447
      %v463 = vadd.f32 %v462, %v448
      %v464 = vadd.f32 %v463, %v449
      %v465 = vadd.f32 %v464, %v450
      %v466 = vadd.f32 %v465, %v451
      %v467 = vrot.slane %v466, 4
      %v468 = vadd.f32 %v466, %v467
      %v469 = vrot.slane %v468, 2
      %v470 = vadd.f32 %v468, %v469
      %v471 = vrot.slane %v470, 1
      %v472 = vadd.f32 %v470, %v471
      %v473 = vmul.f32 %v472, 0.0078125
      %v474 = vsub.f32 %v436, %v473
      %v475 = vsub.f32 %v437, %v473
      %v476 = vsub.f32 %v438, %v473
      %v477 = vsub.f32 %v439, %v473
      %v478 = vsub.f32 %v440, %v473
      %v479 = vsub.f32 %v441, %v473
      %v480 = vsub.f32 %v442, %v473
      %v481 = vsub.f32 %v443, %v473
      %v482 = vsub.f32 %v444, %v473
      %v483 = vsub.f32 %v445, %v473
      %v484 = vsub.f32 %v446, %v473
      %v485 = vsub.f32 %v447, %v473
      %v486 = vsub.f32 %v448, %v473
      %v487 = vsub.f32 %v449, %v473
      %v488 = vsub.f32 %v450, %v473
      %v489 = vsub.f32 %v451, %v473
      %v490 = vmul.f32 %v474, %v474
      %v491 = vmul.f32 %v475, %v475
      %v492 = vmul.f32 %v476, %v476
      %v493 = vmul.f32 %v477, %v477
      %v494 = vmul.f32 %v478, %v478
      %v495 = vmul.f32 %v479, %v479
      %v496 = vmul.f32 %v480, %v480
      %v497 = vmul.f32 %v481, %v481
      %v498 = vmul.f32 %v482, %v482
      %v499 = vmul.f32 %v483, %v483
      %v500 = vmul.f32 %v484, %v484
      %v501 = vmul.f32 %v485, %v485
      %v502 = vmul.f32 %v486, %v486
      %v503 = vmul.f32 %v487, %v487
      %v504 = vmul.f32 %v488, %v488
      %v505 = vmul.f32 %v489, %v489
      %v506 = vadd.f32 %v490, %v491
      %v507 = vadd.f32 %v506, %v492
      %v508 = vadd.f32 %v507, %v493
      %v509 = vadd.f32 %v508, %v494
      %v510 = vadd.f32 %v509, %v495
      %v511 = vadd.f32 %v510, %v496
      %v512 = vadd.f32 %v511, %v497
      %v513 = vadd.f32 %v512, %v498
      %v514 = vadd.f32 %v513, %v499
      %v515 = vadd.f32 %v514, %v500
      %v516 = vadd.f32 %v515, %v501
      %v517 = vadd.f32 %v516, %v502
      %v518 = vadd.f32 %v517, %v503
      %v519 = vadd.f32 %v518, %v504
      %v520 = vadd.f32 %v519, %v505
      %v521 = vrot.slane %v520, 4
      %v522 = vadd.f32 %v520, %v521
      %v523 = vrot.slane %v522, 2
      %v524 = vadd.f32 %v522, %v523
      %v525 = vrot.slane %v524, 1
      %v526 = vadd.f32 %v524, %v525
      %v527 = vmul.f32 %v526, 0.0078125
      %v528 = vadd.f32 %v527, 1e-05
      %v529 = vrsqrt.pop %v528
      %v530 = vmul.f32 %v474, %v529
      %v531 = vmul.f32 %v475, %v529
      %v532 = vmul.f32 %v476, %v529
      %v533 = vmul.f32 %v477, %v529
      %v534 = vmul.f32 %v478, %v529
      %v535 = vmul.f32 %v479, %v529
      %v536 = vmul.f32 %v480, %v529
      %v537 = vmul.f32 %v481, %v529
      %v538 = vmul.f32 %v482, %v529
      %v539 = vmul.f32 %v483, %v529
      %v540 = vmul.f32 %v484, %v529
      %v541 = vmul.f32 %v485, %v529
      %v542 = vmul.f32 %v486, %v529
      %v543 = vmul.f32 %v487, %v529
      %v544 = vmul.f32 %v488, %v529
      %v545 = vmul.f32 %v489, %v529
      %v546 = vld [vmem:[%s3] sm:$0x1]
      %v548 = vlaneseq
      %v549 = vshrl.u32 %v548, 7
      %v550 = vsub.s32 0, %v549
      %v551 = vrot.slane %v546, %v550
      %v553 = vmul.f32 %v530, %v551
      %v554 = vmul.f32 %v531, %v551
      %v555 = vmul.f32 %v532, %v551
      %v556 = vmul.f32 %v533, %v551
      %v557 = vmul.f32 %v534, %v551
      %v558 = vmul.f32 %v535, %v551
      %v559 = vmul.f32 %v536, %v551
      %v560 = vmul.f32 %v537, %v551
      %v561 = vmul.f32 %v538, %v551
      %v562 = vmul.f32 %v539, %v551
      %v563 = vmul.f32 %v540, %v551
      %v564 = vmul.f32 %v541, %v551
      %v565 = vmul.f32 %v542, %v551
      %v566 = vmul.f32 %v543, %v551
      %v567 = vmul.f32 %v544, %v551
      %v568 = vmul.f32 %v545, %v551
      %v569 = vld [vmem:[%s4] sm:$0x1]
      %v571 = vlaneseq
      %v572 = vshrl.u32 %v571, 7
      %v573 = vsub.s32 0, %v572
      %v574 = vrot.slane %v569, %v573
      %v576 = vadd.f32 %v553, %v574
      %v577 = vadd.f32 %v554, %v574
      %v578 = vadd.f32 %v555, %v574
      %v579 = vadd.f32 %v556, %v574
      %v580 = vadd.f32 %v557, %v574
      %v581 = vadd.f32 %v558, %v574
      %v582 = vadd.f32 %v559, %v574
      %v583 = vadd.f32 %v560, %v574
      %v584 = vadd.f32 %v561, %v574
      %v585 = vadd.f32 %v562, %v574
      %v586 = vadd.f32 %v563, %v574
      %v587 = vadd.f32 %v564, %v574
      %v588 = vadd.f32 %v565, %v574
      %v589 = vadd.f32 %v566, %v574
      %v590 = vadd.f32 %v567, %v574
      %v591 = vadd.f32 %v568, %v574
      %v592 = vmax.f32 %v576, 0.0
      %v593 = vmax.f32 %v577, 0.0
      %v594 = vmax.f32 %v578, 0.0
      %v595 = vmax.f32 %v579, 0.0
      %v596 = vmax.f32 %v580, 0.0
      %v597 = vmax.f32 %v581, 0.0
      %v598 = vmax.f32 %v582, 0.0
      %v599 = vmax.f32 %v583, 0.0
      %v600 = vmax.f32 %v584, 0.0
      %v601 = vmax.f32 %v585, 0.0
      %v602 = vmax.f32 %v586, 0.0
      %v603 = vmax.f32 %v587, 0.0
      %v604 = vmax.f32 %v588, 0.0
      %v605 = vmax.f32 %v589, 0.0
      %v606 = vmax.f32 %v590, 0.0
      %v607 = vmax.f32 %v591, 0.0
      %v608 = vpack.c.bf16 %v593, %v592
      %v609 = vpack.c.bf16 %v595, %v594
      %v610 = vpack.c.bf16 %v597, %v596
      %v611 = vpack.c.bf16 %v599, %v598
      %v612 = vpack.c.bf16 %v601, %v600
      %v613 = vpack.c.bf16 %v603, %v602
      %v614 = vpack.c.bf16 %v605, %v604
      %v615 = vpack.c.bf16 %v607, %v606
      %v616 = vld [vmem:[#allocation8] sm:$0xff]
      %v617 = vld [vmem:[#allocation8 + $0x8] sm:$0xff]
      %v618 = vld [vmem:[#allocation8 + $0x10] sm:$0xff]
      %v619 = vld [vmem:[#allocation8 + $0x18] sm:$0xff]
      %v620 = vld [vmem:[#allocation8 + $0x20] sm:$0xff]
      %v621 = vld [vmem:[#allocation8 + $0x28] sm:$0xff]
      %v622 = vld [vmem:[#allocation8 + $0x30] sm:$0xff]
      %v623 = vld [vmem:[#allocation8 + $0x38] sm:$0xff]
      %v624 = vld [vmem:[#allocation8 + $0x40] sm:$0xff]
      %v625 = vld [vmem:[#allocation8 + $0x48] sm:$0xff]
      %v626 = vld [vmem:[#allocation8 + $0x50] sm:$0xff]
      %v627 = vld [vmem:[#allocation8 + $0x58] sm:$0xff]
      %v628 = vld [vmem:[#allocation8 + $0x60] sm:$0xff]
      %v629 = vld [vmem:[#allocation8 + $0x68] sm:$0xff]
      %v630 = vld [vmem:[#allocation8 + $0x70] sm:$0xff]
      %v631 = vld [vmem:[#allocation8 + $0x78] sm:$0xff]
      %v632 = vld [vmem:[%s6] sm:$0x3]
      %v634 = vlaneseq
      %v635 = vshrl.u32 %v634, 7
      %v636 = vsub.s32 0, %v635
      %v637 = vrot.slane %v632, %v636
      %v638 = vlaneseq
      %v639 = vshrl.u32 %v638, 7
      %v640 = vsub.s32 1, %v639
      %v641 = vrot.slane %v632, %v640
      %v660 = vunpack.c.l.b16 %v616
      %v661 = vunpack.c.h.b16 %v616
      %v662 = vunpack.c.l.b16 %v617
      %v663 = vunpack.c.h.b16 %v617
      %v664 = vunpack.c.l.b16 %v618
      %v665 = vunpack.c.h.b16 %v618
      %v666 = vunpack.c.l.b16 %v619
      %v667 = vunpack.c.h.b16 %v619
      %v668 = vunpack.c.l.b16 %v620
      %v669 = vunpack.c.h.b16 %v620
      %v670 = vunpack.c.l.b16 %v621
      %v671 = vunpack.c.h.b16 %v621
      %v672 = vunpack.c.l.b16 %v622
      %v673 = vunpack.c.h.b16 %v622
      %v674 = vunpack.c.l.b16 %v623
      %v675 = vunpack.c.h.b16 %v623
      %v676 = vunpack.c.l.b16 %v624
      %v677 = vunpack.c.h.b16 %v624
      %v678 = vunpack.c.l.b16 %v625
      %v679 = vunpack.c.h.b16 %v625
      %v680 = vunpack.c.l.b16 %v626
      %v681 = vunpack.c.h.b16 %v626
      %v682 = vunpack.c.l.b16 %v627
      %v683 = vunpack.c.h.b16 %v627
      %v684 = vunpack.c.l.b16 %v628
      %v685 = vunpack.c.h.b16 %v628
      %v686 = vunpack.c.l.b16 %v629
      %v687 = vunpack.c.h.b16 %v629
      %v688 = vunpack.c.l.b16 %v630
      %v689 = vunpack.c.h.b16 %v630
      %v690 = vunpack.c.l.b16 %v631
      %v691 = vunpack.c.h.b16 %v631
      %v692 = vpack.c.b16 %v662, %v660
      %v693 = vpack.c.b16 %v663, %v661
      %v694 = vpack.c.b16 %v666, %v664
      %v695 = vpack.c.b16 %v667, %v665
      %v696 = vpack.c.b16 %v670, %v668
      %v697 = vpack.c.b16 %v671, %v669
      %v698 = vpack.c.b16 %v674, %v672
      %v699 = vpack.c.b16 %v675, %v673
      %v700 = vpack.c.b16 %v678, %v676
      %v701 = vpack.c.b16 %v679, %v677
      %v702 = vpack.c.b16 %v682, %v680
      %v703 = vpack.c.b16 %v683, %v681
      %v704 = vpack.c.b16 %v686, %v684
      %v705 = vpack.c.b16 %v687, %v685
      %v706 = vpack.c.b16 %v690, %v688
      %v707 = vpack.c.b16 %v691, %v689
      %724 = vmatprep.subr.bf16.mxu0 %v693
      %725 = vmatpush1.bf16.msra.mxu0 %v692
      %726 = vmatprep.subr.bf16.mxu0 %v695
      %727 = vmatpush1.bf16.msra.mxu0 %v694
      %728 = vmatprep.subr.bf16.mxu0 %v697
      %729 = vmatpush1.bf16.msra.mxu0 %v696
      %730 = vmatprep.subr.bf16.mxu0 %v699
      %731 = vmatpush1.bf16.msra.mxu0 %v698
      %732 = vmatprep.subr.bf16.mxu0 %v701
      %733 = vmatpush1.bf16.msra.mxu0 %v700
      %734 = vmatprep.subr.bf16.mxu0 %v703
      %735 = vmatpush1.bf16.msra.mxu0 %v702
      %736 = vmatprep.subr.bf16.mxu0 %v705
      %737 = vmatpush1.bf16.msra.mxu0 %v704
      %738 = vmatprep.subr.bf16.mxu0 %v707
      %739 = vmatpush1.bf16.msra.mxu0 %v706
      %740 = vmatprep.subr.bf16.mxu0 0
      %741 = vmatpush1.bf16.msra.mxu0 0
      %742 = vmatprep.subr.bf16.mxu0 0
      %743 = vmatpush1.bf16.msra.mxu0 0
      %744 = vmatprep.subr.bf16.mxu0 0
      %745 = vmatpush1.bf16.msra.mxu0 0
      %746 = vmatprep.subr.bf16.mxu0 0
      %747 = vmatpush1.bf16.msra.mxu0 0
      %748 = vmatprep.subr.bf16.mxu0 0
      %749 = vmatpush1.bf16.msra.mxu0 0
      %750 = vmatprep.subr.bf16.mxu0 0
      %751 = vmatpush1.bf16.msra.mxu0 0
      %752 = vmatprep.subr.bf16.mxu0 0
      %753 = vmatpush1.bf16.msra.mxu0 0
      %754 = vmatprep.subr.bf16.mxu0 0
      %755 = vmatpush1.bf16.msra.mxu0 0
      %756 = vmatprep.mubr.bf16.mxu0 0
      %757 = vmatmul.mubr.bf16.gmra.mrb[0].mxu0 %v608
      %v758 = vpop.f32.mrb[0].mxu0
      %v759 = vadd.f32 %v637, %v758
      %v760 = vpop.f32.mrb[0].mxu0
      %v761 = vadd.f32 %v641, %v760
      %v762 = vpop.f32.mrb[0].mxu0
      %v763 = vadd.f32 %v637, %v762
      %v764 = vpop.f32.mrb[0].mxu0
      %v765 = vadd.f32 %v641, %v764
      %766 = vmatprep.mubr.bf16.mxu0 0
      %767 = vmatmul.mubr.bf16.gmra.mrb[0].mxu0 %v609
      %v768 = vpop.f32.mrb[0].mxu0
      %v769 = vadd.f32 %v637, %v768
      %v770 = vpop.f32.mrb[0].mxu0
      %v771 = vadd.f32 %v641, %v770
      %v772 = vpop.f32.mrb[0].mxu0
      %v773 = vadd.f32 %v637, %v772
      %v774 = vpop.f32.mrb[0].mxu0
      %v775 = vadd.f32 %v641, %v774
      %776 = vmatprep.mubr.bf16.mxu0 0
      %777 = vmatmul.mubr.bf16.gmra.mrb[0].mxu0 %v610
      %v778 = vpop.f32.mrb[0].mxu0
      %v779 = vadd.f32 %v637, %v778
      %v780 = vpop.f32.mrb[0].mxu0
      %v781 = vadd.f32 %v641, %v780
      %v782 = vpop.f32.mrb[0].mxu0
      %v783 = vadd.f32 %v637, %v782
      %v784 = vpop.f32.mrb[0].mxu0
      %v785 = vadd.f32 %v641, %v784
      %786 = vmatprep.mubr.bf16.mxu0 0
      %787 = vmatmul.mubr.bf16.gmra.mrb[0].mxu0 %v611
      %v788 = vpop.f32.mrb[0].mxu0
      %v789 = vadd.f32 %v637, %v788
      %v790 = vpop.f32.mrb[0].mxu0
      %v791 = vadd.f32 %v641, %v790
      %v792 = vpop.f32.mrb[0].mxu0
      %v793 = vadd.f32 %v637, %v792
      %v794 = vpop.f32.mrb[0].mxu0
      %v795 = vadd.f32 %v641, %v794
      %796 = vmatprep.mubr.bf16.mxu0 0
      %797 = vmatmul.mubr.bf16.gmra.mrb[0].mxu0 %v612
      %v798 = vpop.f32.mrb[0].mxu0
      %v799 = vadd.f32 %v637, %v798
      %v800 = vpop.f32.mrb[0].mxu0
      %v801 = vadd.f32 %v641, %v800
      %v802 = vpop.f32.mrb[0].mxu0
      %v803 = vadd.f32 %v637, %v802
      %v804 = vpop.f32.mrb[0].mxu0
      %v805 = vadd.f32 %v641, %v804
      %806 = vmatprep.mubr.bf16.mxu0 0
      %807 = vmatmul.mubr.bf16.gmra.mrb[0].mxu0 %v613
      %v808 = vpop.f32.mrb[0].mxu0
      %v809 = vadd.f32 %v637, %v808
      %v810 = vpop.f32.mrb[0].mxu0
      %v811 = vadd.f32 %v641, %v810
      %v812 = vpop.f32.mrb[0].mxu0
      %v813 = vadd.f32 %v637, %v812
      %v814 = vpop.f32.mrb[0].mxu0
      %v815 = vadd.f32 %v641, %v814
      %816 = vmatprep.mubr.bf16.mxu0 0
      %817 = vmatmul.mubr.bf16.gmra.mrb[0].mxu0 %v614
      %v818 = vpop.f32.mrb[0].mxu0
      %v819 = vadd.f32 %v637, %v818
      %v820 = vpop.f32.mrb[0].mxu0
      %v821 = vadd.f32 %v641, %v820
      %v822 = vpop.f32.mrb[0].mxu0
      %v823 = vadd.f32 %v637, %v822
      %v824 = vpop.f32.mrb[0].mxu0
      %v825 = vadd.f32 %v641, %v824
      %826 = vmatprep.mubr.bf16.mxu0 0
      %827 = vmatmul.mubr.bf16.gmra.mrb[0].mxu0 %v615
      %v828 = vpop.f32.mrb[0].mxu0
      %v829 = vadd.f32 %v637, %v828
      %v830 = vpop.f32.mrb[0].mxu0
      %v831 = vadd.f32 %v641, %v830
      %v832 = vpop.f32.mrb[0].mxu0
      %v833 = vadd.f32 %v637, %v832
      %v834 = vpop.f32.mrb[0].mxu0
      %v835 = vadd.f32 %v641, %v834
      %836 = vdwg.mxu0
      %837 = vst [vmem:[#allocation9] sm:$0xff] %v759
      %838 = vst [vmem:[#allocation9 + $0x8] sm:$0xff] %v761
      %839 = vst [vmem:[#allocation9 + $0x10] sm:$0xff] %v763
      %840 = vst [vmem:[#allocation9 + $0x18] sm:$0xff] %v765
      %841 = vst [vmem:[#allocation9 + $0x20] sm:$0xff] %v769
      %842 = vst [vmem:[#allocation9 + $0x28] sm:$0xff] %v771
      %843 = vst [vmem:[#allocation9 + $0x30] sm:$0xff] %v773
      %844 = vst [vmem:[#allocation9 + $0x38] sm:$0xff] %v775
      %845 = vst [vmem:[#allocation9 + $0x40] sm:$0xff] %v779
      %846 = vst [vmem:[#allocation9 + $0x48] sm:$0xff] %v781
      %847 = vst [vmem:[#allocation9 + $0x50] sm:$0xff] %v783
      %848 = vst [vmem:[#allocation9 + $0x58] sm:$0xff] %v785
      %849 = vst [vmem:[#allocation9 + $0x60] sm:$0xff] %v789
      %850 = vst [vmem:[#allocation9 + $0x68] sm:$0xff] %v791
      %851 = vst [vmem:[#allocation9 + $0x70] sm:$0xff] %v793
      %852 = vst [vmem:[#allocation9 + $0x78] sm:$0xff] %v795
      %853 = vst [vmem:[#allocation9 + $0x80] sm:$0xff] %v799
      %854 = vst [vmem:[#allocation9 + $0x88] sm:$0xff] %v801
      %855 = vst [vmem:[#allocation9 + $0x90] sm:$0xff] %v803
      %856 = vst [vmem:[#allocation9 + $0x98] sm:$0xff] %v805
      %857 = vst [vmem:[#allocation9 + $0xa0] sm:$0xff] %v809
      %858 = vst [vmem:[#allocation9 + $0xa8] sm:$0xff] %v811
      %859 = vst [vmem:[#allocation9 + $0xb0] sm:$0xff] %v813
      %860 = vst [vmem:[#allocation9 + $0xb8] sm:$0xff] %v815
      %861 = vst [vmem:[#allocation9 + $0xc0] sm:$0xff] %v819
      %862 = vst [vmem:[#allocation9 + $0xc8] sm:$0xff] %v821
      %863 = vst [vmem:[#allocation9 + $0xd0] sm:$0xff] %v823
      %864 = vst [vmem:[#allocation9 + $0xd8] sm:$0xff] %v825
      %865 = vst [vmem:[#allocation9 + $0xe0] sm:$0xff] %v829
      %866 = vst [vmem:[#allocation9 + $0xe8] sm:$0xff] %v831
      %867 = vst [vmem:[#allocation9 + $0xf0] sm:$0xff] %v833
      %868 = vst [vmem:[#allocation9 + $0xf8] sm:$0xff] %v835
    $region49: #{tpu_custom_call.1} parent=1 // pred_fallthru
      _
    // Predicated region
    $region50: #{tpu_custom_call.1} parent=1 // pred_check
      _
    $region51: #{tpu_custom_call.1} parent=1 // pred_check_branch
      %870 = sbr.rel (0) target = $region53
    $region52: #{tpu_custom_call.1} parent=1 // pred_region
      %s872 = ssub.s32 4096, 4096
      %873 = vsyncadd [#allocation5], %s872
      %s874 = sshll.u32 [#allocation9], 4
      %s875 = int_to_ptr.vmem [resolvable:$true] %s874
      %880 = dma.vmem_to_hbm [thread:$0]  %s875, 4096, %s7, [#allocation5], 256, 256, 16
    $region53: #{tpu_custom_call.1} parent=1 // pred_fallthru
      _
    // Predicated region
    $region54: #{tpu_custom_call.1} parent=1 // pred_check
      _
    $region55: #{tpu_custom_call.1} parent=1 // pred_check_branch
      %882 = sbr.rel (0) target = $region57
    $region56: #{tpu_custom_call.1} parent=1 // pred_region
      %883 = dma.done [#allocation5], 4096
    $region57: #{tpu_custom_call.1} parent=1 // pred_fallthru
      _
    %884 = vsyncpa [#allocation4], 1
    %885 = vsyncpa [#allocation7], 1
    %886 = vsyncpa [#allocation5], 1

</llo_original>
